<compile_context>
chip_gen: v7x
topology: tpu7x:2x2x1
jax: 0.10.0
libtpu: 0.0.40
codegen_flags: <defaults>
</compile_context>

<pallas_src>
import math
import jax
import jax.numpy as jnp
from jax.experimental import pallas as pl
from jax.experimental.pallas import tpu as pltpu


def _make_margin_kernel(*, s, m, tc, is_infer, compute_dtype):
    cos_m = math.cos(m)
    sin_m = math.sin(m)
    mm = sin_m * m
    threshold = math.cos(math.pi - m)

    def kernel(*refs):
        if is_infer:
            ixn_ref, x_ref, w_ref, o_ref, wsq_ref = refs
            label_ref = None
        else:
            label_ref, ixn_ref, x_ref, w_ref, o_ref, wsq_ref = refs

        # Read grid coordinates at top level only (never inside pl.when).
        j = pl.program_id(0)            # class-tile index
        k = pl.program_id(1)            # embedding-tile index (reduction)
        nk = pl.num_programs(1)
        col_base = j * tc

        @pl.when(k == 0)
        def _init():
            o_ref[...] = jnp.zeros_like(o_ref)
            wsq_ref[...] = jnp.zeros_like(wsq_ref)

        x = x_ref[...]
        w = w_ref[...]

        # Fused weight column-norm accumulation (always in f32).
        wf = w.astype(jnp.float32)
        wsq_ref[...] += jnp.sum(wf * wf, axis=0, keepdims=True)

        if compute_dtype is not None:
            x = x.astype(compute_dtype)
            w = w.astype(compute_dtype)
        o_ref[...] += jnp.dot(x, w, preferred_element_type=jnp.float32)

        @pl.when(k == nk - 1)
        def _epilogue():
            # 1/||w_col|| ; the tiny floor only guards exactly-zero (padded)
            # columns, real columns are untouched.
            inv_wn = jax.lax.rsqrt(jnp.maximum(wsq_ref[...], 1e-30))  # (1, tc)
            # Normalize BEFORE the clamp (row norm * col norm).
            cos_theta = o_ref[...] * ixn_ref[...] * inv_wn
            cos_theta = jnp.clip(cos_theta, -1.0, 1.0)
            sin_theta = jnp.sqrt(jnp.maximum(1.0 - cos_theta * cos_theta, 0.0))
            cos_theta_m = cos_theta * cos_m - sin_theta * sin_m
            keep_val = cos_theta - mm
            cos_theta_m = jnp.where(
                (cos_theta - threshold) <= 0.0, keep_val, cos_theta_m
            )
            if is_infer:
                out = cos_theta
            else:
                col = (
                    jax.lax.broadcasted_iota(jnp.int32, cos_theta.shape, 1)
                    + col_base
                )
                out = jnp.where(col == label_ref[...], cos_theta_m, cos_theta)
            o_ref[...] = (out * s).astype(o_ref.dtype)

    return kernel


def margin_head(fea, label, weight, *, s=64.0, m=0.5, is_infer=False,
                tc=512, tk=512, compute_dtype=None):
    """fea: (B, E) f32, label: (B,) int, weight: (E, C) f32 -> (B, C) f32."""
    B, E = fea.shape
    E2, C = weight.shape
    assert E == E2

    # --- tile selection (multiples of 128, clamped to the padded problem) ---
    tc = max(128, (min(tc, pl.cdiv(C, 128) * 128) // 128) * 128)
    tk = max(128, (min(tk, pl.cdiv(E, 128) * 128) // 128) * 128)
    C_pad = pl.cdiv(C, tc) * tc
    E_pad = pl.cdiv(E, tk) * tk

    # --- tiny host-side glue: inverse row norm of fea, zero padding ---------
    fea = fea.astype(jnp.float32)
    inv_xn = 1.0 / jnp.maximum(
        jnp.linalg.norm(fea, ord=2, axis=1, keepdims=True), 1e-30
    )                                                    # (B, 1) f32
    fea_p = fea
    w_p = weight.astype(jnp.float32)
    if E_pad != E:
        fea_p = jnp.pad(fea_p, ((0, 0), (0, E_pad - E)))
        w_p = jnp.pad(w_p, ((0, E_pad - E), (0, 0)))
    if C_pad != C:
        w_p = jnp.pad(w_p, ((0, 0), (0, C_pad - C)))

    kernel = _make_margin_kernel(
        s=s, m=m, tc=tc, is_infer=is_infer, compute_dtype=compute_dtype
    )

    in_specs = []
    operands = []
    if not is_infer:
        label2d = label.astype(jnp.int32).reshape(B, 1)
        in_specs.append(pl.BlockSpec((B, 1), lambda j, k: (0, 0)))   # labels
        operands.append(label2d)
    in_specs += [
        pl.BlockSpec((B, 1), lambda j, k: (0, 0)),     # 1/||fea_row||
        pl.BlockSpec((B, tk), lambda j, k: (0, k)),    # fea (full batch block)
        pl.BlockSpec((tk, tc), lambda j, k: (k, j)),   # weight (read once)
    ]
    operands += [inv_xn, fea_p, w_p]
    # TODO(synk): for very large B, keep the whole fea slab VMEM-resident
    # instead of re-streaming it once per class tile.

    grid = (C_pad // tc, E_pad // tk)
    out = pl.pallas_call(
        kernel,
        out_shape=jax.ShapeDtypeStruct((B, C_pad), jnp.float32),
        grid_spec=pltpu.PrefetchScalarGridSpec(
            num_scalar_prefetch=0,
            grid=grid,
            in_specs=in_specs,
            out_specs=pl.BlockSpec((B, tc), lambda j, k: (0, j)),
            scratch_shapes=[pltpu.VMEM((1, tc), jnp.float32)],  # sum(w^2) acc
        ),
        compiler_params=pltpu.CompilerParams(
            dimension_semantics=("parallel", "arbitrary")
        ),
    )(*operands)

    if C_pad != C:
        out = out[:, :C]
    return out


def margin_head_ref(fea, label, weight, *, s=64.0, m=0.5, is_infer=False):
    """Pure-JAX reference mirroring the PyTorch forward."""
    cos_m, sin_m = math.cos(m), math.sin(m)
    mm = sin_m * m
    threshold = math.cos(math.pi - m)
    fea_n = fea / jnp.linalg.norm(fea, ord=2, axis=1, keepdims=True)
    w_n = weight / jnp.linalg.norm(weight, ord=2, axis=0, keepdims=True)
    cos_theta = jnp.clip(fea_n @ w_n, -1.0, 1.0)
    sin_theta = jnp.sqrt(jnp.maximum(1.0 - cos_theta ** 2, 0.0))
    cos_theta_m = cos_theta * cos_m - sin_theta * sin_m
    keep_val = cos_theta - mm
    cos_theta_m = jnp.where((cos_theta - threshold) <= 0.0, keep_val, cos_theta_m)
    out = cos_theta
    if not is_infer:
        onehot = jax.nn.one_hot(label, cos_theta.shape[1], dtype=bool)
        out = jnp.where(onehot, cos_theta_m, cos_theta)
    return out * s


if __name__ == "__main__":
    # Small shapes consistent with the module: batch=8, emb=256, classes=500
    # (C=500 also exercises the class-dim padding path, padded to 512).
    B, E, C = 8, 256, 500
    s_, m_ = 64.0, 0.5

    key = jax.random.PRNGKey(0)
    k_fea, k_w, k_lab = jax.random.split(key, 3)

    fea = jax.random.normal(k_fea, (B, E), dtype=jnp.float32)
    # deterministic init mimicking uniform_(-1,1).renorm_(2,1,1e-5).mul_(1e5)
    w = jax.random.uniform(k_w, (E, C), dtype=jnp.float32, minval=-1.0, maxval=1.0)
    w = w / jnp.linalg.norm(w, ord=2, axis=0, keepdims=True)
    label = jax.random.randint(k_lab, (B,), 0, C, dtype=jnp.int32)

    # training path (f32 MXU path)
    out = jax.block_until_ready(
        margin_head(fea, label, w, s=s_, m=m_, is_infer=False, tc=128, tk=128)
    )
    ref = margin_head_ref(fea, label, w, s=s_, m=m_, is_infer=False)
    assert out.shape == (B, C)
    assert jnp.allclose(out, ref, atol=2e-3, rtol=1e-3), "train-path mismatch"

    # inference path (no labels passed to the kernel)
    out_inf = jax.block_until_ready(
        margin_head(fea, label, w, s=s_, m=m_, is_infer=True, tc=128, tk=128)
    )
    ref_inf = margin_head_ref(fea, label, w, s=s_, m=m_, is_infer=True)
    assert jnp.allclose(out_inf, ref_inf, atol=2e-3, rtol=1e-3), "infer mismatch"

    # bf16 MXU path (v6e/v7x optimization); f32 accumulation, loose tolerance.
    out_bf16 = jax.block_until_ready(
        margin_head(fea, label, w, s=s_, m=m_, is_infer=False,
                    tc=128, tk=128, compute_dtype=jnp.bfloat16)
    )
    assert out_bf16.shape == (B, C)
    assert jnp.allclose(out_bf16, ref, atol=1.0), "bf16-path mismatch"

    print("KERNEL_OK")
</pallas_src>

<mosaic_0001>
module attributes {stable_mosaic.version = 11 : i64} {
  func.func @kernel(%arg0: i32, %arg1: i32, %arg2: memref<8x1xi32, #tpu.memory_space<vmem>>, %arg3: memref<8x1xf32, #tpu.memory_space<vmem>>, %arg4: memref<8x128xf32, #tpu.memory_space<vmem>>, %arg5: memref<128x128xf32, #tpu.memory_space<vmem>>, %arg6: memref<8x128xf32, #tpu.memory_space<vmem>>, %arg7: memref<1x128xf32, #tpu.memory_space<vmem>>) attributes {dimension_semantics = [#tpu.dimension_semantics<parallel>, #tpu.dimension_semantics<arbitrary>], iteration_bounds = array<i64: 4, 2>, scalar_prefetch = 0 : i64, scratch_operands = 1 : i64, tpu.core_type = #tpu.core_type<tc>, window_params = [{pipeline_mode = #tpu.pipeline_mode<synchronous>, transform_indices = @transform_0, window_bounds = array<i64: 8, 1>}, {pipeline_mode = #tpu.pipeline_mode<synchronous>, transform_indices = @transform_1, window_bounds = array<i64: 8, 1>}, {transform_indices = @transform_2, window_bounds = array<i64: 8, 128>}, {transform_indices = @transform_3, window_bounds = array<i64: 128, 128>}, {transform_indices = @transform_4, window_bounds = array<i64: 8, 128>}]} {
    %c128_i32 = arith.constant 128 : i32
    %0 = arith.muli %arg0, %c128_i32 : i32
    %c0_i32 = arith.constant 0 : i32
    %1 = arith.cmpi eq, %arg1, %c0_i32 : i32
    %2 = arith.extui %1 : i1 to i32
    %c0_i32_0 = arith.constant 0 : i32
    %3 = arith.cmpi ne, %2, %c0_i32_0 : i32
    scf.if %3 {
      %cst_14 = arith.constant 0.000000e+00 : f32
      %19 = vector.broadcast %cst_14 : f32 to vector<8x128xf32>
      %c0_15 = arith.constant 0 : index
      %c0_16 = arith.constant 0 : index
      %20 = vector.load %arg6[%c0_15, %c0_16] : memref<8x128xf32, #tpu.memory_space<vmem>>, vector<8x128xf32>
      tpu.vector_store %arg6[%c0_15, %c0_16], %19 {strides = array<i32>} : memref<8x128xf32, #tpu.memory_space<vmem>>, vector<8x128xf32>,
      %cst_17 = arith.constant 0.000000e+00 : f32
      %21 = vector.broadcast %cst_17 : f32 to vector<1x128xf32>
      %c0_18 = arith.constant 0 : index
      %c0_19 = arith.constant 0 : index
      %22 = vector.load %arg7[%c0_18, %c0_19] : memref<1x128xf32, #tpu.memory_space<vmem>>, vector<1x128xf32>
      tpu.vector_store %arg7[%c0_18, %c0_19], %21 {strides = array<i32>} : memref<1x128xf32, #tpu.memory_space<vmem>>, vector<1x128xf32>,
    } else {
    }
    %c0 = arith.constant 0 : index
    %c0_1 = arith.constant 0 : index
    %4 = vector.load %arg4[%c0, %c0_1] : memref<8x128xf32, #tpu.memory_space<vmem>>, vector<8x128xf32>
    %c0_2 = arith.constant 0 : index
    %c0_3 = arith.constant 0 : index
    %5 = vector.load %arg5[%c0_2, %c0_3] : memref<128x128xf32, #tpu.memory_space<vmem>>, vector<128x128xf32>
    %c0_4 = arith.constant 0 : index
    %c0_5 = arith.constant 0 : index
    %6 = vector.load %arg7[%c0_4, %c0_5] : memref<1x128xf32, #tpu.memory_space<vmem>>, vector<1x128xf32>
    %7 = arith.mulf %5, %5 : vector<128x128xf32>
    %cst = arith.constant dense<0.000000e+00> : vector<128xf32>
    %8 = vector.multi_reduction <add>, %7, %cst [0] : vector<128x128xf32> to vector<128xf32>
    %9 = vector.shape_cast %8 : vector<128xf32> to vector<1x128xf32>
    %10 = arith.addf %6, %9 : vector<1x128xf32>
    %c0_6 = arith.constant 0 : index
    %c0_7 = arith.constant 0 : index
    %11 = vector.load %arg7[%c0_6, %c0_7] : memref<1x128xf32, #tpu.memory_space<vmem>>, vector<1x128xf32>
    tpu.vector_store %arg7[%c0_6, %c0_7], %10 {strides = array<i32>} : memref<1x128xf32, #tpu.memory_space<vmem>>, vector<1x128xf32>,
    %c0_8 = arith.constant 0 : index
    %c0_9 = arith.constant 0 : index
    %12 = vector.load %arg6[%c0_8, %c0_9] : memref<8x128xf32, #tpu.memory_space<vmem>>, vector<8x128xf32>
    %cst_10 = arith.constant dense<0.000000e+00> : vector<8x128xf32>
    %13 = tpu.matmul %4, %5, %cst_10 {dimension_numbers = #tpu.dot_dimension_numbers<[1], [0], [0], [1], [0, 0, 1, 1], [], []>} : vector<8x128xf32>, vector<128x128xf32>, vector<8x128xf32> -> vector<8x128xf32>
    %14 = arith.addf %12, %13 : vector<8x128xf32>
    %c0_11 = arith.constant 0 : index
    %c0_12 = arith.constant 0 : index
    %15 = vector.load %arg6[%c0_11, %c0_12] : memref<8x128xf32, #tpu.memory_space<vmem>>, vector<8x128xf32>
    tpu.vector_store %arg6[%c0_11, %c0_12], %14 {strides = array<i32>} : memref<8x128xf32, #tpu.memory_space<vmem>>, vector<8x128xf32>,
    %c1_i32 = arith.constant 1 : i32
    %16 = arith.cmpi eq, %arg1, %c1_i32 : i32
    %17 = arith.extui %16 : i1 to i32
    %c0_i32_13 = arith.constant 0 : i32
    %18 = arith.cmpi ne, %17, %c0_i32_13 : i32
    scf.if %18 {
      %c0_14 = arith.constant 0 : index
      %c0_15 = arith.constant 0 : index
      %19 = vector.load %arg7[%c0_14, %c0_15] : memref<1x128xf32, #tpu.memory_space<vmem>>, vector<1x128xf32>
      %cst_16 = arith.constant 1.000000e-30 : f32
      %20 = vector.broadcast %cst_16 : f32 to vector<1x128xf32>
      %21 = arith.maximumf %19, %20 : vector<1x128xf32>
      %22 = math.rsqrt %21 : vector<1x128xf32>
      %c0_17 = arith.constant 0 : index
      %c0_18 = arith.constant 0 : index
      %23 = vector.load %arg6[%c0_17, %c0_18] : memref<8x128xf32, #tpu.memory_space<vmem>>, vector<8x128xf32>
      %c0_19 = arith.constant 0 : index
      %c0_20 = arith.constant 0 : index
      %24 = vector.load %arg3[%c0_19, %c0_20] : memref<8x1xf32, #tpu.memory_space<vmem>>, vector<8x1xf32>
      %25 = vector.broadcast %24 : vector<8x1xf32> to vector<8x128xf32>
      %26 = arith.mulf %23, %25 : vector<8x128xf32>
      %27 = vector.broadcast %22 : vector<1x128xf32> to vector<8x128xf32>
      %28 = arith.mulf %26, %27 : vector<8x128xf32>
      %cst_21 = arith.constant -1.000000e+00 : f32
      %cst_22 = arith.constant 1.000000e+00 : f32
      %29 = vector.broadcast %cst_21 : f32 to vector<8x128xf32>
      %30 = arith.maximumf %29, %28 : vector<8x128xf32>
      %31 = vector.broadcast %cst_22 : f32 to vector<8x128xf32>
      %32 = arith.minimumf %31, %30 : vector<8x128xf32>
      %33 = arith.mulf %32, %32 : vector<8x128xf32>
      %cst_23 = arith.constant 1.000000e+00 : f32
      %34 = vector.broadcast %cst_23 : f32 to vector<8x128xf32>
      %35 = arith.subf %34, %33 : vector<8x128xf32>
      %cst_24 = arith.constant 0.000000e+00 : f32
      %36 = vector.broadcast %cst_24 : f32 to vector<8x128xf32>
      %37 = arith.maximumf %35, %36 : vector<8x128xf32>
      %38 = math.sqrt %37 : vector<8x128xf32>
      %cst_25 = arith.constant 0.87758255 : f32
      %39 = vector.broadcast %cst_25 : f32 to vector<8x128xf32>
      %40 = arith.mulf %32, %39 : vector<8x128xf32>
      %cst_26 = arith.constant 0.47942555 : f32
      %41 = vector.broadcast %cst_26 : f32 to vector<8x128xf32>
      %42 = arith.mulf %38, %41 : vector<8x128xf32>
      %43 = arith.subf %40, %42 : vector<8x128xf32>
      %cst_27 = arith.constant 0.239712775 : f32
      %44 = vector.broadcast %cst_27 : f32 to vector<8x128xf32>
      %45 = arith.subf %32, %44 : vector<8x128xf32>
      %cst_28 = arith.constant -0.87758255 : f32
      %46 = vector.broadcast %cst_28 : f32 to vector<8x128xf32>
      %47 = arith.subf %32, %46 : vector<8x128xf32>
      %cst_29 = arith.constant 0.000000e+00 : f32
      %48 = vector.broadcast %cst_29 : f32 to vector<8x128xf32>
      %49 = arith.cmpf ole, %47, %48 : vector<8x128xf32>
      %50 = arith.select %49, %45, %43 : vector<8x128xi1>, vector<8x128xf32>
      %51 = tpu.iota {dimensions = array<i32: 1>} : vector<8x128xi32>
      %52 = vector.broadcast %0 : i32 to vector<8x128xi32>
      %53 = arith.addi %51, %52 : vector<8x128xi32>
      %c0_30 = arith.constant 0 : index
      %c0_31 = arith.constant 0 : index
      %54 = vector.load %arg2[%c0_30, %c0_31] : memref<8x1xi32, #tpu.memory_space<vmem>>, vector<8x1xi32>
      %55 = vector.broadcast %54 : vector<8x1xi32> to vector<8x128xi32>
      %56 = arith.cmpi eq, %53, %55 : vector<8x128xi32>
      %57 = arith.select %56, %50, %32 : vector<8x128xi1>, vector<8x128xf32>
      %cst_32 = arith.constant 6.400000e+01 : f32
      %58 = vector.broadcast %cst_32 : f32 to vector<8x128xf32>
      %59 = arith.mulf %57, %58 : vector<8x128xf32>
      %c0_33 = arith.constant 0 : index
      %c0_34 = arith.constant 0 : index
      %60 = vector.load %arg6[%c0_33, %c0_34] : memref<8x128xf32, #tpu.memory_space<vmem>>, vector<8x128xf32>
      tpu.vector_store %arg6[%c0_33, %c0_34], %59 {strides = array<i32>} : memref<8x128xf32, #tpu.memory_space<vmem>>, vector<8x128xf32>,
    } else {
    }
    return
  }
  func.func @transform_0(%arg0: i32, %arg1: i32) -> (i32, i32) {
    %c0_i32 = arith.constant 0 : i32
    %c0_i32_0 = arith.constant 0 : i32
    %c0_i32_1 = arith.constant 0 : i32
    return %c0_i32, %c0_i32_0 : i32, i32
  }
  func.func @transform_1(%arg0: i32, %arg1: i32) -> (i32, i32) {
    %c0_i32 = arith.constant 0 : i32
    %c0_i32_0 = arith.constant 0 : i32
    %c0_i32_1 = arith.constant 0 : i32
    return %c0_i32, %c0_i32_0 : i32, i32
  }
  func.func @transform_2(%arg0: i32, %arg1: i32) -> (i32, i32) {
    %c0_i32 = arith.constant 0 : i32
    %c0_i32_0 = arith.constant 0 : i32
    return %c0_i32, %arg1 : i32, i32
  }
  func.func @transform_3(%arg0: i32, %arg1: i32) -> (i32, i32) {
    %c0_i32 = arith.constant 0 : i32
    return %arg1, %arg0 : i32, i32
  }
  func.func @transform_4(%arg0: i32, %arg1: i32) -> (i32, i32) {
    %c0_i32 = arith.constant 0 : i32
    %c0_i32_0 = arith.constant 0 : i32
    return %c0_i32, %arg0 : i32, i32
  }
}

</mosaic_0001>

<llo_original>
// kernel: tpu_custom_call.1
$region0: #{tpu_custom_call.1}
  #allocation0 [shape = 'u32[]', space=smem, size = 0x4, offset = 0x4, fixed_abs, tag = 'smem constant byte address 0x4 - core index']
  #allocation1 [shape = 'u32[144,128]{1,0:T(1,128)}', space=vmem, size = 0x12000, scoped, tag = 'internal scratch']
  #allocation2 [shape = 'f32[1,128]{1,0:T(1,128)}', space=vmem, size = 0x200, scoped, tag = 'scratch operand']
  %s0 = inlined_call_operand.vmem [shape: s32[8,1], index: 0, kind: input, shape index: {}]
  %s1 = inlined_call_operand.vmem [shape: f32[8,1], index: 1, kind: input, shape index: {}]
  %s2 = inlined_call_operand.vmem [shape: f32[8,256], index: 2, kind: input, shape index: {}]
  %s3 = inlined_call_operand.hbm [shape: f32[256,512], index: 3, kind: input, shape index: {}]
  %s4 = inlined_call_operand.hbm [shape: f32[8,512], index: 4, kind: output, shape index: {}]
  %s5 = sld [smem:[#allocation0]]
  $region61: #{tpu_custom_call.1} parent=0
    _
  %s7 = ssub.s32 1, %s5
  %s8 = scalar_select 0, %s7, %s5
  $region1: #{tpu_custom_call.1} parent=0
    #allocation3 [shape = 'u8[131072]{0}', space=vmem, size = 0x20000, scoped, tag = 'input window, operand 3']
    #allocation4 [shape = 's32[2]{0}', space=sflag, size = 0x8, scoped, tag = 'scoped memory for tpu_custom_call.1']
    #allocation5 [shape = 's32[2]{0}', space=sflag, size = 0x8, scoped, tag = 'scoped memory for tpu_custom_call.1']
    #allocation6 [shape = 'u8[8192]{0}', space=vmem, size = 0x2000, scoped, tag = 'output window, operand 0']
    %9 = vsyncpa [#allocation4], 0
    %s10 = scalar_lea.sflag [#allocation4], 1
    %11 = vsyncpa %s10, 0
    %12 = vsyncpa [#allocation5], 0
    %s13 = scalar_lea.sflag [#allocation5], 1
    %14 = vsyncpa %s13, 0
    loop: start=0, step=1, limit=10
    $region2: #{tpu_custom_call.1} parent=1 // loop_pre_header
      _
    $region3: #{tpu_custom_call.1} parent=1 // loop_header
      %s16 = sphi 0, %s20
      %p17 = scmp.ge.s32.totalorder %s16, 10
      %s23 = sphi 0, %s35
      %s24 = sphi 0, %s31
      %s25 = sphi 0, %s23
      %s26 = sphi 0, %s24
      %s27 = sphi 0, %s25
      %s28 = sphi 0, %s26
      %s36 = sphi 0, %s36
      %s38 = sphi 0, %s36
      %s39 = sphi 0, %s38
      %s53 = sphi 0, %s39
      %s57 = sphi 0, %s57
      %s59 = sphi 0, %s57
      %s60 = sphi 0, %s59
      %s74 = sphi 0, %s60
      %s80 = sphi 0, %s82
      %s83 = sphi 0, %s80
      %s84 = sphi 0, %s83
      %s100 = sphi 0, %s84
      %s108 = sphi 0, %s110
      %s111 = sphi 0, %s108
      %s112 = sphi 0, %s111
      %s128 = sphi 0, %s112
      %s134 = sphi 0, %s136
      %s137 = sphi 0, %s134
      %s138 = sphi 0, %s137
      %s154 = sphi 0, %s138
    $region4: #{tpu_custom_call.1} parent=1 // loop_header_branch
      %19 = sbr.rel (%p17) target = $region8
    $region5: #{tpu_custom_call.1} parent=1 // loop_body
      %s21 = ssub.s32 %s16, 1
      %s22 = ssub.s32 %s16, 2
      %s29 = sadd.s32 1, %s24
      %p30 = scmp.ge.s32.totalorder %s29, 2
      %s31 = scalar_select %p30, 0, %s29
      %s32 = sadd.s32 1, %s23
      %s33 = scalar_select %p30, %s32, %s23
      %p34 = scmp.ge.s32.totalorder %s33, 4
      %s35 = scalar_select %p34, 0, %s33
      %s37 = sadd.s32 %s36, 1
      %p40 = scmp.eq.s32.totalorder %s16, 7
      %p41 = scmp.ne.s32.totalorder %s36, %s38
      %p42 = scmp.eq.s32.totalorder %s16, 0
      %p43 = por %p41, %p42
      %p44 = scmp.ne.s32.totalorder %s36, %s38
      %p45 = scmp.eq.s32.totalorder %s21, 7
      %p46 = por %p44, %p45
      %p47 = scmp.ne.s32.totalorder %s38, %s39
      %p48 = scmp.eq.s32.totalorder %s21, 0
      %p49 = por %p47, %p48
      %p50 = scmp.ne.s32.totalorder %s38, %s39
      %p51 = scmp.eq.s32.totalorder %s22, 7
      %p52 = por %p50, %p51
      %p54 = scmp.ne.s32.totalorder %s39, %s53
      %p55 = scmp.eq.s32.totalorder %s22, 0
      %p56 = por %p54, %p55
      %s58 = sadd.s32 %s57, 1
      %p61 = scmp.eq.s32.totalorder %s16, 7
      %p62 = scmp.ne.s32.totalorder %s57, %s59
      %p63 = scmp.eq.s32.totalorder %s16, 0
      %p64 = por %p62, %p63
      %p65 = scmp.ne.s32.totalorder %s57, %s59
      %p66 = scmp.eq.s32.totalorder %s21, 7
      %p67 = por %p65, %p66
      %p68 = scmp.ne.s32.totalorder %s59, %s60
      %p69 = scmp.eq.s32.totalorder %s21, 0
      %p70 = por %p68, %p69
      %p71 = scmp.ne.s32.totalorder %s59, %s60
      %p72 = scmp.eq.s32.totalorder %s22, 7
      %p73 = por %p71, %p72
      %p75 = scmp.ne.s32.totalorder %s60, %s74
      %p76 = scmp.eq.s32.totalorder %s22, 0
      %p77 = por %p75, %p76
      %s78 = ssub.s32 %s24, %s31
      %p79 = scmp.eq.s32.totalorder %s78, 0
      %s81 = sadd.s32 %s80, 1
      %s82 = scalar_select %p79, %s80, %s81
      %p85 = pneg %p79
      %p86 = scmp.eq.s32.totalorder %s16, 7
      %p87 = por %p85, %p86
      %p88 = scmp.ne.s32.totalorder %s80, %s83
      %p89 = scmp.eq.s32.totalorder %s16, 0
      %p90 = por %p88, %p89
      %p91 = scmp.ne.s32.totalorder %s80, %s83
      %p92 = scmp.eq.s32.totalorder %s21, 7
      %p93 = por %p91, %p92
      %p94 = scmp.ne.s32.totalorder %s83, %s84
      %p95 = scmp.eq.s32.totalorder %s21, 0
      %p96 = por %p94, %p95
      %p97 = scmp.ne.s32.totalorder %s83, %s84
      %p98 = scmp.eq.s32.totalorder %s22, 7
      %p99 = por %p97, %p98
      %p101 = scmp.ne.s32.totalorder %s84, %s100
      %p102 = scmp.eq.s32.totalorder %s22, 0
      %p103 = por %p101, %p102
      %s104 = ssub.s32 %s24, %s31
      %s105 = ssub.s32 %s23, %s35
      %s106 = sor.u32 %s104, %s105
      %p107 = scmp.eq.s32.totalorder %s106, 0
      %s109 = sadd.s32 %s108, 1
      %s110 = scalar_select %p107, %s108, %s109
      %p113 = pneg %p107
      %p114 = scmp.eq.s32.totalorder %s16, 7
      %p115 = por %p113, %p114
      %p116 = scmp.ne.s32.totalorder %s108, %s111
      %p117 = scmp.eq.s32.totalorder %s16, 0
      %p118 = por %p116, %p117
      %p119 = scmp.ne.s32.totalorder %s108, %s111
      %p120 = scmp.eq.s32.totalorder %s21, 7
      %p121 = por %p119, %p120
      %p122 = scmp.ne.s32.totalorder %s111, %s112
      %p123 = scmp.eq.s32.totalorder %s21, 0
      %p124 = por %p122, %p123
      %p125 = scmp.ne.s32.totalorder %s111, %s112
      %p126 = scmp.eq.s32.totalorder %s22, 7
      %p127 = por %p125, %p126
      %p129 = scmp.ne.s32.totalorder %s112, %s128
      %p130 = scmp.eq.s32.totalorder %s22, 0
      %p131 = por %p129, %p130
      %s132 = ssub.s32 %s23, %s35
      %p133 = scmp.eq.s32.totalorder %s132, 0
      %s135 = sadd.s32 %s134, 1
      %s136 = scalar_select %p133, %s134, %s135
      %p139 = pneg %p133
      %p140 = scmp.eq.s32.totalorder %s16, 7
      %p141 = por %p139, %p140
      %p142 = scmp.ne.s32.totalorder %s134, %s137
      %p143 = scmp.eq.s32.totalorder %s16, 0
      %p144 = por %p142, %p143
      %p145 = scmp.ne.s32.totalorder %s134, %s137
      %p146 = scmp.eq.s32.totalorder %s21, 7
      %p147 = por %p145, %p146
      %p148 = scmp.ne.s32.totalorder %s137, %s138
      %p149 = scmp.eq.s32.totalorder %s21, 0
      %p150 = por %p148, %p149
      %p151 = scmp.ne.s32.totalorder %s137, %s138
      %p152 = scmp.eq.s32.totalorder %s22, 7
      %p153 = por %p151, %p152
      %p155 = scmp.ne.s32.totalorder %s138, %s154
      %p156 = scmp.eq.s32.totalorder %s22, 0
      %p157 = por %p155, %p156
      %p158 = scmp.le.s32.totalorder 1, %s16
      %p159 = scmp.lt.s32.totalorder %s16, 9
      %p160 = pnand %p158, %p159
      %p161 = pneg %p160
      // Predicated region
      $region9: #{tpu_custom_call.1} parent=5 // pred_check
        _
      $region10: #{tpu_custom_call.1} parent=5 // pred_check_branch
        %163 = sbr.rel (%p160) target = $region12
      $region11: #{tpu_custom_call.1} parent=5 // pred_region
        %s164 = ssub.s32 %s16, 1
        // Predicated region
        $region13: #{tpu_custom_call.1} parent=11 // pred_check
          %p165 = pneg %p49
        $region14: #{tpu_custom_call.1} parent=11 // pred_check_branch
          %167 = sbr.rel (%p165) target = $region16
        $region15: #{tpu_custom_call.1} parent=11 // pred_region
          _
        $region16: #{tpu_custom_call.1} parent=11 // pred_fallthru
          _
        // Predicated region
        $region17: #{tpu_custom_call.1} parent=11 // pred_check
          %p168 = pneg %p70
        $region18: #{tpu_custom_call.1} parent=11 // pred_check_branch
          %170 = sbr.rel (%p168) target = $region20
        $region19: #{tpu_custom_call.1} parent=11 // pred_region
          _
        $region20: #{tpu_custom_call.1} parent=11 // pred_fallthru
          _
      $region12: #{tpu_custom_call.1} parent=5 // pred_fallthru
        _
      %p171 = scmp.lt.s32.totalorder %s16, 8
      // Predicated region
      $region21: #{tpu_custom_call.1} parent=5 // pred_check
        %p172 = pneg %p171
      $region22: #{tpu_custom_call.1} parent=5 // pred_check_branch
        %174 = sbr.rel (%p172) target = $region24
      $region23: #{tpu_custom_call.1} parent=5 // pred_region
        // Predicated region
        $region25: #{tpu_custom_call.1} parent=23 // pred_check
          %p175 = pneg %p90
        $region26: #{tpu_custom_call.1} parent=23 // pred_check_branch
          %177 = sbr.rel (%p175) target = $region28
        $region27: #{tpu_custom_call.1} parent=23 // pred_region
          %p178 = scmp.lt.s32.totalorder %s24, 1
          %s179 = scalar_select %p178, %s24, 1
          %s180 = smul.addr %s179, 8
          %s181 = scalar_lea.vmem %s2, %s180
        $region28: #{tpu_custom_call.1} parent=23 // pred_fallthru
          _
        // Predicated region
        $region29: #{tpu_custom_call.1} parent=23 // pred_check
          %p182 = pneg %p118
        $region30: #{tpu_custom_call.1} parent=23 // pred_check_branch
          %184 = sbr.rel (%p182) target = $region32
        $region31: #{tpu_custom_call.1} parent=23 // pred_region
          %s185 = sand.u32 %s108, 1
          %s186 = scalar_lea.sflag [#allocation4], %s185
          %s187 = sand.u32 %s108, 1
          %s188 = smul.addr %s187, 128
          %s189 = scalar_lea.vmem [#allocation3], %s188
          %s190 = smul.u32 16, %s24
          %s192 = ssub.s32 2048, 2048
          %193 = vsyncadd %s186, %s192
          %s194 = smul.addr %s190, 4
          %s195 = sadd.s32 %s23, %s194
          %s196 = smul.addr %s195, 128
          %s197 = scalar_lea.hbm %s3, %s196
          %s198 = sshll.u32 %s189, 4
          %s199 = int_to_ptr.vmem [resolvable:$true] %s198
          %204 = dma.hbm_to_vmem [thread:$0]  %s197, 2048, %s199, %s186, 512, 128, 8
        $region32: #{tpu_custom_call.1} parent=23 // pred_fallthru
          _
      $region24: #{tpu_custom_call.1} parent=5 // pred_fallthru
        _
      %p205 = scmp.le.s32.totalorder 1, %s16
      %p206 = scmp.lt.s32.totalorder %s16, 9
      %p207 = pnand %p205, %p206
      %p208 = pneg %p207
      // Predicated region
      $region33: #{tpu_custom_call.1} parent=5 // pred_check
        _
      $region34: #{tpu_custom_call.1} parent=5 // pred_check_branch
        %210 = sbr.rel (%p207) target = $region36
      $region35: #{tpu_custom_call.1} parent=5 // pred_region
        %s211 = ssub.s32 %s16, 1
        %s212 = sand.u32 %s111, 1
        %s213 = scalar_lea.sflag [#allocation4], %s212
        %s214 = sand.u32 %s111, 1
        %s215 = smul.addr %s214, 128
        %s216 = scalar_lea.vmem [#allocation3], %s215
        // Predicated region
        $region37: #{tpu_custom_call.1} parent=35 // pred_check
          %p217 = pneg %p124
        $region38: #{tpu_custom_call.1} parent=35 // pred_check_branch
          %219 = sbr.rel (%p217) target = $region40
        $region39: #{tpu_custom_call.1} parent=35 // pred_region
          %220 = dma.done %s213, 2048
        $region40: #{tpu_custom_call.1} parent=35 // pred_fallthru
          _
        %p221 = pneg %p49
        %p222 = pneg %p46
        %p223 = pneg %p70
        %p224 = pneg %p67
        %p225 = scmp.lt.s32.totalorder %s26, 1
        %s226 = scalar_select %p225, %s26, 1
        %s227 = smul.addr %s226, 8
        %s228 = scalar_lea.vmem %s2, %s227
        %p229 = pneg %p96
        %p230 = pneg %p93
        %s231 = sand.u32 %s111, 1
        %s232 = scalar_lea.sflag [#allocation4], %s231
        %s233 = sand.u32 %s111, 1
        %s234 = smul.addr %s233, 128
        %s235 = scalar_lea.vmem [#allocation3], %s234
        %p236 = pneg %p124
        %p237 = pneg %p121
        %p238 = pneg %p150
        %p239 = pneg %p147
        %s240 = sand.u32 %s137, 1
        %s241 = scalar_lea.sflag [#allocation5], %s240
        %s242 = sand.u32 %s137, 1
        %s243 = smul.addr %s242, 8
        %s244 = scalar_lea.vmem [#allocation6], %s243
        %p245 = scmp.lt.s32.totalorder %s26, 1
        %s246 = scalar_select %p245, %s26, 1
        %s247 = smul.addr %s246, 8
        %s248 = scalar_lea.vmem %s2, %s247
        %s249 = smul.u32 16, %s26
        %s250 = smul.u32 %s25, 128
        %p251 = scmp.eq.s32.totalorder %s26, 0
        // Predicated region
        $region41: #{tpu_custom_call.1} parent=35 // pred_check
          %p252 = pneg %p251
        $region42: #{tpu_custom_call.1} parent=35 // pred_check_branch
          %254 = sbr.rel (%p252) target = $region44
        $region43: #{tpu_custom_call.1} parent=35 // pred_region
          %255 = vst [vmem:[%s244] sm:$0xff] 0.0
          %256 = vst [vmem:[#allocation2] sm:$0x1] 0.0
        $region44: #{tpu_custom_call.1} parent=35 // pred_fallthru
          _
        %v257 = vld [vmem:[%s248] sm:$0xff]
        %v258 = vld [vmem:[%s216] sm:$0xff]
        %v259 = vld [vmem:[%s216 + $0x8] sm:$0xff]
        %v260 = vld [vmem:[%s216 + $0x10] sm:$0xff]
        %v261 = vld [vmem:[%s216 + $0x18] sm:$0xff]
        %v262 = vld [vmem:[%s216 + $0x20] sm:$0xff]
        %v263 = vld [vmem:[%s216 + $0x28] sm:$0xff]
        %v264 = vld [vmem:[%s216 + $0x30] sm:$0xff]
        %v265 = vld [vmem:[%s216 + $0x38] sm:$0xff]
        %v266 = vld [vmem:[%s216 + $0x40] sm:$0xff]
        %v267 = vld [vmem:[%s216 + $0x48] sm:$0xff]
        %v268 = vld [vmem:[%s216 + $0x50] sm:$0xff]
        %v269 = vld [vmem:[%s216 + $0x58] sm:$0xff]
        %v270 = vld [vmem:[%s216 + $0x60] sm:$0xff]
        %v271 = vld [vmem:[%s216 + $0x68] sm:$0xff]
        %v272 = vld [vmem:[%s216 + $0x70] sm:$0xff]
        %v273 = vld [vmem:[%s216 + $0x78] sm:$0xff]
        %v274 = vld [vmem:[#allocation2] sm:$0x1]
        %v275 = vmul.f32 %v258, %v258
        %v276 = vmul.f32 %v259, %v259
        %v277 = vmul.f32 %v260, %v260
        %v278 = vmul.f32 %v261, %v261
        %v279 = vmul.f32 %v262, %v262
        %v280 = vmul.f32 %v263, %v263
        %v281 = vmul.f32 %v264, %v264
        %v282 = vmul.f32 %v265, %v265
        %v283 = vmul.f32 %v266, %v266
        %v284 = vmul.f32 %v267, %v267
        %v285 = vmul.f32 %v268, %v268
        %v286 = vmul.f32 %v269, %v269
        %v287 = vmul.f32 %v270, %v270
        %v288 = vmul.f32 %v271, %v271
        %v289 = vmul.f32 %v272, %v272
        %v290 = vmul.f32 %v273, %v273
        %v291 = vadd.f32 %v275, %v276
        %v292 = vadd.f32 %v291, %v277
        %v293 = vadd.f32 %v292, %v278
        %v294 = vadd.f32 %v293, %v279
        %v295 = vadd.f32 %v294, %v280
        %v296 = vadd.f32 %v295, %v281
        %v297 = vadd.f32 %v296, %v282
        %v298 = vadd.f32 %v297, %v283
        %v299 = vadd.f32 %v298, %v284
        %v300 = vadd.f32 %v299, %v285
        %v301 = vadd.f32 %v300, %v286
        %v302 = vadd.f32 %v301, %v287
        %v303 = vadd.f32 %v302, %v288
        %v304 = vadd.f32 %v303, %v289
        %v305 = vadd.f32 %v304, %v290
        %v306 = vrot.slane %v305, 4
        %v307 = vadd.f32 %v305, %v306
        %v308 = vrot.slane %v307, 2
        %v309 = vadd.f32 %v307, %v308
        %v310 = vrot.slane %v309, 1
        %v311 = vadd.f32 %v309, %v310
        %v312 = vadd.f32 %v274, %v311
        %313 = vst [vmem:[#allocation2] sm:$0x1] %v312
        %v314 = vld [vmem:[%s244] sm:$0xff]
        %315 = vmatprep.subr.mxu0 0.0
        %316 = vmatpush1.msra.mxu0 %v258
        %317 = vmatprep.subr.mxu0 0.0
        %318 = vmatpush1.msra.mxu0 %v259
        %319 = vmatprep.subr.mxu0 0.0
        %320 = vmatpush1.msra.mxu0 %v260
        %321 = vmatprep.subr.mxu0 0.0
        %322 = vmatpush1.msra.mxu0 %v261
        %323 = vmatprep.subr.mxu0 0.0
        %324 = vmatpush1.msra.mxu0 %v262
        %325 = vmatprep.subr.mxu0 0.0
        %326 = vmatpush1.msra.mxu0 %v263
        %327 = vmatprep.subr.mxu0 0.0
        %328 = vmatpush1.msra.mxu0 %v264
        %329 = vmatprep.subr.mxu0 0.0
        %330 = vmatpush1.msra.mxu0 %v265
        %331 = vmatprep.subr.mxu0 0.0
        %332 = vmatpush1.msra.mxu0 %v266
        %333 = vmatprep.subr.mxu0 0.0
        %334 = vmatpush1.msra.mxu0 %v267
        %335 = vmatprep.subr.mxu0 0.0
        %336 = vmatpush1.msra.mxu0 %v268
        %337 = vmatprep.subr.mxu0 0.0
        %338 = vmatpush1.msra.mxu0 %v269
        %339 = vmatprep.subr.mxu0 0.0
        %340 = vmatpush1.msra.mxu0 %v270
        %341 = vmatprep.subr.mxu0 0.0
        %342 = vmatpush1.msra.mxu0 %v271
        %343 = vmatprep.subr.mxu0 0.0
        %344 = vmatpush1.msra.mxu0 %v272
        %345 = vmatprep.subr.mxu0 0.0
        %346 = vmatpush1.msra.mxu0 %v273
        %347 = vmatprep.subr.mxu0 0.0
        %348 = vmatpush1.msra.mxu0 0.0
        %349 = vmatprep.subr.mxu0 0.0
        %350 = vmatpush1.msra.mxu0 0.0
        %351 = vmatprep.subr.mxu0 0.0
        %352 = vmatpush1.msra.mxu0 0.0
        %353 = vmatprep.subr.mxu0 0.0
        %354 = vmatpush1.msra.mxu0 0.0
        %355 = vmatprep.subr.mxu0 0.0
        %356 = vmatpush1.msra.mxu0 0.0
        %357 = vmatprep.subr.mxu0 0.0
        %358 = vmatpush1.msra.mxu0 0.0
        %359 = vmatprep.subr.mxu0 0.0
        %360 = vmatpush1.msra.mxu0 0.0
        %361 = vmatprep.subr.mxu0 0.0
        %362 = vmatpush1.msra.mxu0 0.0
        %363 = vmatprep.subr.mxu0 0.0
        %364 = vmatpush1.msra.mxu0 0.0
        %365 = vmatprep.subr.mxu0 0.0
        %366 = vmatpush1.msra.mxu0 0.0
        %367 = vmatprep.subr.mxu0 0.0
        %368 = vmatpush1.msra.mxu0 0.0
        %369 = vmatprep.subr.mxu0 0.0
        %370 = vmatpush1.msra.mxu0 0.0
        %371 = vmatprep.subr.mxu0 0.0
        %372 = vmatpush1.msra.mxu0 0.0
        %373 = vmatprep.subr.mxu0 0.0
        %374 = vmatpush1.msra.mxu0 0.0
        %375 = vmatprep.subr.mxu0 0.0
        %376 = vmatpush1.msra.mxu0 0.0
        %377 = vmatprep.subr.mxu0 0.0
        %378 = vmatpush1.msra.mxu0 0.0
        %379 = vmatprep.mubr.f32.mxu0 0.0
        %380 = vmatmul.mubr.f32.gmra.mrb[0].mxu0 %v257
        %v381 = vpop.f32.mrb[0].mxu0
        %v382 = vadd.f32 0.0, %v381
        %v383 = vpop.f32.mrb[0].mxu0
        %384 = vdwg.mxu0
        %v385 = vadd.f32 %v314, %v382
        %386 = vst [vmem:[%s244] sm:$0xff] %v385
        %p387 = scmp.eq.s32.totalorder %s26, 1
        // Predicated region
        $region45: #{tpu_custom_call.1} parent=35 // pred_check
          %p388 = pneg %p387
        $region46: #{tpu_custom_call.1} parent=35 // pred_check_branch
          %390 = sbr.rel (%p388) target = $region48
        $region47: #{tpu_custom_call.1} parent=35 // pred_region
          %v391 = vld [vmem:[#allocation2] sm:$0x1]
          %v392 = vmax.f32 %v391, 1e-30
          %v393 = vrsqrt.pop %v392
          %v394 = vld [vmem:[%s244] sm:$0xff]
          %v395 = vld [vmem:[%s1] sm:$0xff]
          %397 = vset.pattern.permute.xlu0 0
          %398 = vperm.xlu0 %397, %v395
          %v399 = vpop.permute.xlu0 %398
          %v401 = vmul.f32 %v394, %v399
          %v403 = vlaneseq
          %v404 = vshrl.u32 %v403, 7
          %v405 = vsub.s32 0, %v404
          %v406 = vrot.slane %v393, %v405
          %v408 = vmul.f32 %v401, %v406
          %v409 = vmax.f32 %v408, -1.0
          %v410 = vmin.f32 %v409, 1.0
          %v411 = vmul.f32 %v410, %v410
          %v412 = vsub.f32 1.0, %v411
          %v413 = vmax.f32 %v412, 0.0
          %v414 = vrsqrt.pop %v413
          %v415 = vmul.f32 %v413, %v414
          %vm416 = vcmp.eq.f32.partialorder %v413, inf
          %v417 = vsel %vm416, %v413, %v415
          %vm418 = vcmp.eq.f32.partialorder %v413, 0.0
          %v419 = vand.u32 %v413, 2147483648
          %v420 = vsel %vm418, %v419, %v417
          %v421 = vmul.f32 %v410, 0.87758255
          %v422 = vmul.f32 %v420, 0.47942555
          %v423 = vsub.f32 %v421, %v422
          %v424 = vsub.f32 %v410, 0.23971277
          %v425 = vsub.f32 %v410, -0.87758255
          %vm426 = vcmp.le.f32.partialorder %v425, 0.0
          %v427 = vsel %vm426, %v424, %v423
          %v428 = vlaneseq
          %v429 = vand.u32 %v428, 127
          %v430 = vstv %s250
          %v431 = vadd.s32 %v429, %v430
          %v432 = vld [vmem:[%s0] sm:$0xff]
          %433 = vset.pattern.permute.xlu0 0
          %434 = vperm.xlu0 %433, %v432
          %v435 = vpop.permute.xlu0 %434
          %vm436 = vcmp.eq.s32.totalorder %v431, %v435
          %v437 = vsel %vm436, %v427, %v410
          %v438 = vmul.f32 %v437, 64.0
          %439 = vst [vmem:[%s244] sm:$0xff] %v438
        $region48: #{tpu_custom_call.1} parent=35 // pred_fallthru
          _
        %s440 = sand.u32 %s137, 1
        %s441 = scalar_lea.sflag [#allocation5], %s440
        %s442 = sand.u32 %s137, 1
        %s443 = smul.addr %s442, 8
        %s444 = scalar_lea.vmem [#allocation6], %s443
        // Predicated region
        $region49: #{tpu_custom_call.1} parent=35 // pred_check
          %p445 = pneg %p147
        $region50: #{tpu_custom_call.1} parent=35 // pred_check_branch
          %447 = sbr.rel (%p445) target = $region52
        $region51: #{tpu_custom_call.1} parent=35 // pred_region
          %s449 = ssub.s32 128, 128
          %450 = vsyncadd %s441, %s449
          %s451 = smul.addr %s25, 128
          %s452 = scalar_lea.hbm %s4, %s451
          %s454 = sshll.u32 %s444, 4
          %s455 = int_to_ptr.vmem [resolvable:$true] %s454
          %457 = dma.vmem_to_hbm [thread:$0]  %s455, 128, %s452, %s441
        $region52: #{tpu_custom_call.1} parent=35 // pred_fallthru
          _
      $region36: #{tpu_custom_call.1} parent=5 // pred_fallthru
        _
      %p458 = scmp.le.s32.totalorder 2, %s16
      // Predicated region
      $region53: #{tpu_custom_call.1} parent=5 // pred_check
        %p459 = pneg %p458
      $region54: #{tpu_custom_call.1} parent=5 // pred_check_branch
        %461 = sbr.rel (%p459) target = $region56
      $region55: #{tpu_custom_call.1} parent=5 // pred_region
        %s462 = ssub.s32 %s16, 2
        // Predicated region
        $region57: #{tpu_custom_call.1} parent=55 // pred_check
          %p463 = pneg %p153
        $region58: #{tpu_custom_call.1} parent=55 // pred_check_branch
          %465 = sbr.rel (%p463) target = $region60
        $region59: #{tpu_custom_call.1} parent=55 // pred_region
          %s466 = sand.u32 %s138, 1
          %s467 = scalar_lea.sflag [#allocation5], %s466
          %s468 = sand.u32 %s138, 1
          %s469 = smul.addr %s468, 8
          %s470 = scalar_lea.vmem [#allocation6], %s469
          %471 = dma.done %s467, 128
        $region60: #{tpu_custom_call.1} parent=55 // pred_fallthru
          _
      $region56: #{tpu_custom_call.1} parent=5 // pred_fallthru
        _
    $region6: #{tpu_custom_call.1} parent=1 // loop_footer
      %s20 = sadd.s32 1, %s16
    $region7: #{tpu_custom_call.1} parent=1 // loop_footer_branch
      %15 = sbr.rel target = $region3
    $region8: #{tpu_custom_call.1} parent=1 // loop_exit
      _
    %472 = vsyncpa [#allocation4], 1
    %s473 = scalar_lea.sflag [#allocation4], 1
    %474 = vsyncpa %s473, 1
    %475 = vsyncpa [#allocation5], 1
    %s476 = scalar_lea.sflag [#allocation5], 1
    %477 = vsyncpa %s476, 1

</llo_original>
